<compile_context>
chip_gen: v7x
topology: tpu7x:2x2x1
jax: 0.10.0
libtpu: 0.0.40
codegen_flags: <defaults>
</compile_context>

<pallas_src>
import functools
import math

import jax
import jax.numpy as jnp
from jax.experimental import pallas as pl
from jax.experimental.pallas import tpu as pltpu


_VMEM_BUDGET = 8 * 1024 * 1024   # target double-buffered working set (bytes)
_MAX_PACK_WIDTH = 2048           # widest lane-dense output block we pack to
_TP_CAP = 2048                   # rows/tile beyond this only amortizes ~0.35us/step


def _cdiv(a: int, b: int) -> int:
    return -(-a // b)


def _round_up(x: int, m: int) -> int:
    return ((x + m - 1) // m) * m


def _pick_tile(rows: int, per_row_bytes: int, row_align: int):
    """Rows/tile from a VMEM budget; >=2 grid steps when possible; small tail pad."""
    budget_rows = (_VMEM_BUDGET // (2 * per_row_bytes)) // row_align * row_align
    cap = max(row_align, min(_TP_CAP, budget_rows))
    num_tiles = max(1, _cdiv(rows, cap))
    if rows >= 2 * row_align:
        num_tiles = max(num_tiles, 2)     # let v7x's two TensorCores both work
    tile = _round_up(_cdiv(rows, num_tiles), row_align)
    grid_n = _cdiv(rows, tile)
    return tile, grid_n


def _t2v_packed_kernel(x_ref, wmat_ref, b_ref, o_ref, *, size: int, groups: int):
    """Lane-dense kernel.

    x_ref    : [TP, G]   x for logical row p*G + g lives at [p, g]
    wmat_ref : [G, W]    W_mat[g, l] = w[l % size] iff l // size == g else 0
                         (for G == 1 it is just w, shape [1, W])
    b_ref    : [1, W]    bias tiled G times along lanes
    o_ref    : [TP, W]   row-major view of [TP*G, size]
    """
    if groups == 1:
        z = x_ref[...] * wmat_ref[...] + b_ref[...]
    else:
        # Replication + FMA folded into one tiny MXU matmul (MXU is otherwise idle).
        z = jnp.dot(x_ref[...], wmat_ref[...],
                    preferred_element_type=jnp.float32,
                    precision=jax.lax.Precision.HIGHEST) + b_ref[...]
    lane = jax.lax.broadcasted_iota(jnp.int32, o_ref.shape, 1)
    if (size & (size - 1)) == 0:
        feat = lane & (size - 1)
    else:
        feat = lane % size
    o_ref[...] = jnp.where(feat == 0, z, jnp.sin(z)).astype(o_ref.dtype)


def _t2v_rowtile_kernel(x_ref, w_ref, b_ref, o_ref):
    """Generic fallback: x_ref [TN, 1], w_ref/b_ref [1, S], o_ref [TN, S]."""
    z = x_ref[...] * w_ref[...] + b_ref[...]
    col = jax.lax.broadcasted_iota(jnp.int32, z.shape, 1)
    o_ref[...] = jnp.where(col == 0, z, jnp.sin(z)).astype(o_ref.dtype)


def time2vec(x, weight, bias, *, out_dtype=jnp.float32):
    """x: [..., 1]; weight, bias: [1, size]. Returns [..., size] in out_dtype."""
    assert x.shape[-1] == 1, "Time2Vec expects trailing singleton dim on x"
    size = int(weight.shape[-1])
    out_dtype = jnp.dtype(out_dtype)
    lead = x.shape[:-1]
    n = 1
    for d in lead:
        n *= int(d)

    x2 = x.reshape(n, 1).astype(jnp.float32)
    w = weight.reshape(1, size).astype(jnp.float32)
    b = bias.reshape(1, size).astype(jnp.float32)

    row_align = 16 if out_dtype == jnp.bfloat16 else 8
    itemsize = out_dtype.itemsize
    cparams = pltpu.CompilerParams(dimension_semantics=("parallel",))

    width = size // math.gcd(size, 128) * 128          # lcm(size, 128)
    if width <= _MAX_PACK_WIDTH:
        # --- Lane-dense packed path -------------------------------------------------
        g = width // size
        np_rows = _cdiv(n, g)
        # VMEM per row per buffer: x block lane-pads to 128 words + output block.
        per_row = 128 * 4 + width * itemsize
        tp, grid_n = _pick_tile(np_rows, per_row, row_align)
        np_pad = tp * grid_n
        n_pad = np_pad * g
        if n_pad != n:
            x2 = jnp.pad(x2, ((0, n_pad - n), (0, 0)))
        xg = x2.reshape(np_pad, g)

        # Grid-invariant constants (constant-folded by XLA when weights are static).
        if g == 1:
            wmat = w                                     # [1, width]
            bvec = b
        else:
            lane = jnp.arange(width)
            sel = (lane // size)[None, :] == jnp.arange(g)[:, None]
            wmat = jnp.where(sel, jnp.tile(w, (1, g)), 0.0)   # [g, width]
            bvec = jnp.tile(b, (1, g))                        # [1, width]

        cost = pl.CostEstimate(
            flops=2 * np_pad * g * width + 2 * np_pad * width,
            transcendentals=np_pad * width,
            bytes_accessed=(np_pad * g * 4 + np_pad * width * itemsize
                            + (g + 1) * width * 4),
        )
        kernel = functools.partial(_t2v_packed_kernel, size=size, groups=g)
        out = pl.pallas_call(
            kernel,
            out_shape=jax.ShapeDtypeStruct((np_pad, width), out_dtype),
            grid=(grid_n,),
            in_specs=[
                pl.BlockSpec((tp, g), lambda i: (i, 0)),
                pl.BlockSpec((g, width), lambda i: (0, 0)),   # resident across grid
                pl.BlockSpec((1, width), lambda i: (0, 0)),
            ],
            out_specs=pl.BlockSpec((tp, width), lambda i: (i, 0)),
            compiler_params=cparams,
            cost_estimate=cost,
        )(xg, wmat, bvec)
        out = out.reshape(np_pad * g, size)[:n]
    else:
        # --- Generic fallback (masked stores; only for awkward `size`) ---------------
        size_pad = _round_up(size, 128)
        per_row = 128 * 4 + size_pad * 4
        tn, grid_n = _pick_tile(n, per_row, row_align)
        n_pad = tn * grid_n
        if n_pad != n:
            x2 = jnp.pad(x2, ((0, n_pad - n), (0, 0)))
        cost = pl.CostEstimate(
            flops=2 * n_pad * size,
            transcendentals=n_pad * size,
            bytes_accessed=n_pad * 4 + n_pad * size * itemsize + 2 * size * 4,
        )
        out = pl.pallas_call(
            _t2v_rowtile_kernel,
            out_shape=jax.ShapeDtypeStruct((n_pad, size), out_dtype),
            grid=(grid_n,),
            in_specs=[
                pl.BlockSpec((tn, 1), lambda i: (i, 0)),
                pl.BlockSpec((1, size), lambda i: (0, 0)),
                pl.BlockSpec((1, size), lambda i: (0, 0)),
            ],
            out_specs=pl.BlockSpec((tn, size), lambda i: (i, 0)),
            compiler_params=cparams,
            cost_estimate=cost,
        )(x2, w, b)
        out = out[:n]

    return out.reshape(*lead, size)


def init_time2vec_params(key, size):
    """Deterministic kaiming_uniform-style init for [1, size] weight/bias."""
    kw, kb = jax.random.split(key)
    fan_in = size                       # torch kaiming_uniform on [1, size]
    gain = jnp.sqrt(2.0)                # nonlinearity='relu'
    bound = gain * jnp.sqrt(3.0 / fan_in)
    weight = jax.random.uniform(kw, (1, size), jnp.float32, -bound, bound)
    bias = jax.random.uniform(kb, (1, size), jnp.float32, -bound, bound)
    return weight, bias


def _reference(x, weight, bias):
    linear_term = weight[:, 0] * x + bias[:, 0]
    periodic = jnp.sin(weight[:, 1:] * x + bias[:, 1:])
    return jnp.concatenate([linear_term, periodic], axis=-1)


if __name__ == "__main__":
    key = jax.random.PRNGKey(0)
    k_params, k_x = jax.random.split(key)

    size = 32
    batch, seq = 2, 8
    weight, bias = init_time2vec_params(k_params, size)
    x = jax.random.normal(k_x, (batch, seq, 1), jnp.float32)

    # 1) Packed path (size | 128): MXU-folded replication, lane-dense stores.
    out = jax.block_until_ready(time2vec(x, weight, bias))
    ref = _reference(x, weight, bias)
    assert out.shape == (batch, seq, size), out.shape
    assert jnp.allclose(out, ref, atol=1e-5, rtol=1e-5)

    # 2) Ragged row count (exercises pad + slice logic, >=2 grid steps).
    x_ragged = jax.random.normal(k_x, (3, 67, 1), jnp.float32)
    out_r = jax.block_until_ready(time2vec(x_ragged, weight, bias))
    assert jnp.allclose(out_r, _reference(x_ragged, weight, bias),
                        atol=1e-5, rtol=1e-5)

    # 3) size % 128 == 0 -> groups == 1 broadcast-FMA path (still lane-dense).
    w128, b128 = init_time2vec_params(k_params, 128)
    out128 = jax.block_until_ready(time2vec(x, w128, b128))
    assert out128.shape == (batch, seq, 128)
    assert jnp.allclose(out128, _reference(x, w128, b128), atol=1e-5, rtol=1e-5)

    # 4) Small-lcm size (48 -> width 384, groups 8): lane-dense via lcm packing.
    w48, b48 = init_time2vec_params(k_params, 48)
    out48 = jax.block_until_ready(time2vec(x, w48, b48))
    assert out48.shape == (batch, seq, 48)
    assert jnp.allclose(out48, _reference(x, w48, b48), atol=1e-5, rtol=1e-5)

    # 5) Awkward size (33) -> generic masked-store fallback.
    w33, b33 = init_time2vec_params(k_params, 33)
    out33 = jax.block_until_ready(time2vec(x, w33, b33))
    assert out33.shape == (batch, seq, 33)
    assert jnp.allclose(out33, _reference(x, w33, b33), atol=1e-5, rtol=1e-5)

    # 6) bf16 store path (compute f32, cast at the store; 16-row tile alignment).
    out_bf = jax.block_until_ready(time2vec(x, weight, bias,
                                            out_dtype=jnp.bfloat16))
    assert out_bf.dtype == jnp.bfloat16
    assert jnp.allclose(out_bf.astype(jnp.float32), ref, atol=5e-2, rtol=5e-2)

    print("KERNEL_OK")
</pallas_src>

<mosaic_0001>
module attributes {stable_mosaic.version = 11 : i64} {
  func.func @_t2v_packed_kernel(%arg0: i32, %arg1: memref<8x4xf32, #tpu.memory_space<vmem>>, %arg2: memref<4x128xf32, #tpu.memory_space<vmem>>, %arg3: memref<1x128xf32, #tpu.memory_space<vmem>>, %arg4: memref<8x128xf32, #tpu.memory_space<vmem>>) attributes {dimension_semantics = [#tpu.dimension_semantics<parallel>], iteration_bounds = array<i64: 1>, scalar_prefetch = 0 : i64, scratch_operands = 0 : i64, tpu.core_type = #tpu.core_type<tc>, window_params = [{transform_indices = @transform_0, window_bounds = array<i64: 8, 4>}, {pipeline_mode = #tpu.pipeline_mode<synchronous>, transform_indices = @transform_1, window_bounds = array<i64: 4, 128>}, {pipeline_mode = #tpu.pipeline_mode<synchronous>, transform_indices = @transform_2, window_bounds = array<i64: 1, 128>}, {transform_indices = @transform_3, window_bounds = array<i64: 8, 128>}]} {
    %c0 = arith.constant 0 : index
    %c0_0 = arith.constant 0 : index
    %0 = vector.load %arg1[%c0, %c0_0] : memref<8x4xf32, #tpu.memory_space<vmem>>, vector<8x4xf32>
    %c0_1 = arith.constant 0 : index
    %c0_2 = arith.constant 0 : index
    %1 = vector.load %arg2[%c0_1, %c0_2] : memref<4x128xf32, #tpu.memory_space<vmem>>, vector<4x128xf32>
    %cst = arith.constant dense<0.000000e+00> : vector<8x128xf32>
    %2 = tpu.matmul %0, %1, %cst {dimension_numbers = #tpu.dot_dimension_numbers<[1], [0], [0], [1], [0, 0, 1, 1], [], []>, precision = #tpu.contract_precision<fp32>} : vector<8x4xf32>, vector<4x128xf32>, vector<8x128xf32> -> vector<8x128xf32>
    %c0_3 = arith.constant 0 : index
    %c0_4 = arith.constant 0 : index
    %3 = vector.load %arg3[%c0_3, %c0_4] : memref<1x128xf32, #tpu.memory_space<vmem>>, vector<1x128xf32>
    %4 = vector.broadcast %3 : vector<1x128xf32> to vector<8x128xf32>
    %5 = arith.addf %2, %4 : vector<8x128xf32>
    %6 = tpu.iota {dimensions = array<i32: 1>} : vector<8x128xi32>
    %c31_i32 = arith.constant 31 : i32
    %7 = vector.broadcast %c31_i32 : i32 to vector<8x128xi32>
    %8 = arith.andi %6, %7 : vector<8x128xi32>
    %c0_i32 = arith.constant 0 : i32
    %9 = vector.broadcast %c0_i32 : i32 to vector<8x128xi32>
    %10 = arith.cmpi eq, %8, %9 : vector<8x128xi32>
    %11 = math.sin %5 : vector<8x128xf32>
    %12 = arith.select %10, %5, %11 : vector<8x128xi1>, vector<8x128xf32>
    %c0_5 = arith.constant 0 : index
    %c0_6 = arith.constant 0 : index
    %13 = vector.load %arg4[%c0_5, %c0_6] : memref<8x128xf32, #tpu.memory_space<vmem>>, vector<8x128xf32>
    tpu.vector_store %arg4[%c0_5, %c0_6], %12 {strides = array<i32>} : memref<8x128xf32, #tpu.memory_space<vmem>>, vector<8x128xf32>,
    return
  }
  func.func @transform_0(%arg0: i32) -> (i32, i32) {
    %c0_i32 = arith.constant 0 : i32
    %c0_i32_0 = arith.constant 0 : i32
    return %arg0, %c0_i32 : i32, i32
  }
  func.func @transform_1(%arg0: i32) -> (i32, i32) {
    %c0_i32 = arith.constant 0 : i32
    %c0_i32_0 = arith.constant 0 : i32
    %c0_i32_1 = arith.constant 0 : i32
    return %c0_i32, %c0_i32_0 : i32, i32
  }
  func.func @transform_2(%arg0: i32) -> (i32, i32) {
    %c0_i32 = arith.constant 0 : i32
    %c0_i32_0 = arith.constant 0 : i32
    %c0_i32_1 = arith.constant 0 : i32
    return %c0_i32, %c0_i32_0 : i32, i32
  }
  func.func @transform_3(%arg0: i32) -> (i32, i32) {
    %c0_i32 = arith.constant 0 : i32
    %c0_i32_0 = arith.constant 0 : i32
    return %arg0, %c0_i32 : i32, i32
  }
}

</mosaic_0001>

<llo_original>
// kernel: tpu_custom_call.1
$region0: #{tpu_custom_call.1}
  #allocation0 [shape = 'u32[]', space=smem, size = 0x4, offset = 0x4, fixed_abs, tag = 'smem constant byte address 0x4 - core index']
  #allocation1 [shape = 'u32[144,128]{1,0:T(1,128)}', space=vmem, size = 0x12000, scoped, tag = 'internal scratch']
  %s0 = inlined_call_operand.vmem [shape: f32[8,4], index: 0, kind: input, shape index: {}]
  %s1 = inlined_call_operand.vmem [shape: f32[4,128], index: 1, kind: input, shape index: {}]
  %s2 = inlined_call_operand.vmem [shape: f32[1,128], index: 2, kind: input, shape index: {}]
  %s3 = inlined_call_operand.hbm [shape: f32[8,128], index: 3, kind: output, shape index: {}]
  %s4 = sld [smem:[#allocation0]]
  $region22: #{tpu_custom_call.1} parent=0
    _
  %s6 = ssub.s32 1, %s4
  %s7 = scalar_select 0, %s6, %s4
  $region1: #{tpu_custom_call.1} parent=0
    #allocation2 [shape = 'u8[4096]{0}', space=vmem, size = 0x1000, scoped, tag = 'output window, operand 0, single buffered']
    #allocation3 [shape = 's32[1]{0}', space=sflag, size = 0x4, scoped, tag = 'scoped memory for tpu_custom_call.1']
    %8 = vsyncpa [#allocation3], 0
    // Predicated region
    $region2: #{tpu_custom_call.1} parent=1 // pred_check
      _
    $region3: #{tpu_custom_call.1} parent=1 // pred_check_branch
      %10 = sbr.rel (0) target = $region5
    $region4: #{tpu_custom_call.1} parent=1 // pred_region
      _
    $region5: #{tpu_custom_call.1} parent=1 // pred_fallthru
      _
    // Predicated region
    $region6: #{tpu_custom_call.1} parent=1 // pred_check
      _
    $region7: #{tpu_custom_call.1} parent=1 // pred_check_branch
      %12 = sbr.rel (0) target = $region9
    $region8: #{tpu_custom_call.1} parent=1 // pred_region
      _
    $region9: #{tpu_custom_call.1} parent=1 // pred_fallthru
      _
    // Predicated region
    $region10: #{tpu_custom_call.1} parent=1 // pred_check
      _
    $region11: #{tpu_custom_call.1} parent=1 // pred_check_branch
      %14 = sbr.rel (0) target = $region13
    $region12: #{tpu_custom_call.1} parent=1 // pred_region
      _
    $region13: #{tpu_custom_call.1} parent=1 // pred_fallthru
      _
    %v15 = vld [vmem:[%s0] sm:$0xff]
    %v16 = vld [vmem:[%s1] sm:$0xf]
    %v17 = vld [vmem:[%s2] sm:$0x1]
    %v19 = vlaneseq
    %v20 = vshrl.u32 %v19, 7
    %v21 = vsub.s32 0, %v20
    %v22 = vrot.slane %v17, %v21
    %vm24 = vcmask 31744
    %v26 = vsel %vm24, %v15, 0
    %vm28 = vcmask 1043456
    %v30 = vsel %vm28, %v16, 0
    %32 = vmatprep.subr.mxu0 0.0
    %v33 = vand.u32 %v30, 4294901760
    %34 = vmatpush1.msra.mxu0 %v33
    %35 = vmatprep.subr.mxu0 0.0
    %36 = vmatpush1.msra.mxu0 0.0
    %37 = vmatprep.subr.mxu0 0.0
    %38 = vmatpush1.msra.mxu0 0.0
    %39 = vmatprep.subr.mxu0 0.0
    %40 = vmatpush1.msra.mxu0 0.0
    %41 = vmatprep.subr.mxu0 0.0
    %42 = vmatpush1.msra.mxu0 0.0
    %43 = vmatprep.subr.mxu0 0.0
    %44 = vmatpush1.msra.mxu0 0.0
    %45 = vmatprep.subr.mxu0 0.0
    %46 = vmatpush1.msra.mxu0 0.0
    %47 = vmatprep.subr.mxu0 0.0
    %48 = vmatpush1.msra.mxu0 0.0
    %49 = vmatprep.subr.mxu0 0.0
    %50 = vmatpush1.msra.mxu0 0.0
    %51 = vmatprep.subr.mxu0 0.0
    %52 = vmatpush1.msra.mxu0 0.0
    %53 = vmatprep.subr.mxu0 0.0
    %54 = vmatpush1.msra.mxu0 0.0
    %55 = vmatprep.subr.mxu0 0.0
    %56 = vmatpush1.msra.mxu0 0.0
    %57 = vmatprep.subr.mxu0 0.0
    %58 = vmatpush1.msra.mxu0 0.0
    %59 = vmatprep.subr.mxu0 0.0
    %60 = vmatpush1.msra.mxu0 0.0
    %61 = vmatprep.subr.mxu0 0.0
    %62 = vmatpush1.msra.mxu0 0.0
    %63 = vmatprep.subr.mxu0 0.0
    %64 = vmatpush1.msra.mxu0 0.0
    %65 = vmatprep.subr.mxu0 0.0
    %66 = vmatpush1.msra.mxu0 0.0
    %67 = vmatprep.subr.mxu0 0.0
    %68 = vmatpush1.msra.mxu0 0.0
    %69 = vmatprep.subr.mxu0 0.0
    %70 = vmatpush1.msra.mxu0 0.0
    %71 = vmatprep.subr.mxu0 0.0
    %72 = vmatpush1.msra.mxu0 0.0
    %73 = vmatprep.subr.mxu0 0.0
    %74 = vmatpush1.msra.mxu0 0.0
    %75 = vmatprep.subr.mxu0 0.0
    %76 = vmatpush1.msra.mxu0 0.0
    %77 = vmatprep.subr.mxu0 0.0
    %78 = vmatpush1.msra.mxu0 0.0
    %79 = vmatprep.subr.mxu0 0.0
    %80 = vmatpush1.msra.mxu0 0.0
    %81 = vmatprep.subr.mxu0 0.0
    %82 = vmatpush1.msra.mxu0 0.0
    %83 = vmatprep.subr.mxu0 0.0
    %84 = vmatpush1.msra.mxu0 0.0
    %85 = vmatprep.subr.mxu0 0.0
    %86 = vmatpush1.msra.mxu0 0.0
    %87 = vmatprep.subr.mxu0 0.0
    %88 = vmatpush1.msra.mxu0 0.0
    %89 = vmatprep.subr.mxu0 0.0
    %90 = vmatpush1.msra.mxu0 0.0
    %91 = vmatprep.subr.mxu0 0.0
    %92 = vmatpush1.msra.mxu0 0.0
    %93 = vmatprep.subr.mxu0 0.0
    %94 = vmatpush1.msra.mxu0 0.0
    %95 = vmatprep.subr.mxu0 0.0
    %96 = vmatpush1.msra.mxu0 0.0
    %97 = vmatprep.mubr.f32.mxu0 0.0
    %v98 = vand.u32 %v26, 4294901760
    %v99 = vsub.f32 %v26, %v98
    %v100 = vand.u32 %v99, 4294901760
    %v101 = vsub.f32 %v99, %v100
    %v102 = vand.u32 %v101, 4294901760
    %103 = vmatmul.mubr.f32.gmra.mrb[0].mxu0 %v102
    %v104 = vpop.f32.mrb[0].mxu0
    %v105 = vadd.f32 %v22, %v104
    %v106 = vpop.f32.mrb[0].mxu0
    %107 = vdwg.mxu0
    %108 = vmatprep.subr.mxu0 0.0
    %v109 = vand.u32 %v30, 4294901760
    %v110 = vsub.f32 %v30, %v109
    %v111 = vand.u32 %v110, 4294901760
    %v112 = vsub.f32 %v110, %v111
    %v113 = vand.u32 %v112, 4294901760
    %114 = vmatpush1.msra.mxu0 %v113
    %115 = vmatprep.subr.mxu0 0.0
    %116 = vmatpush1.msra.mxu0 0.0
    %117 = vmatprep.subr.mxu0 0.0
    %118 = vmatpush1.msra.mxu0 0.0
    %119 = vmatprep.subr.mxu0 0.0
    %120 = vmatpush1.msra.mxu0 0.0
    %121 = vmatprep.subr.mxu0 0.0
    %122 = vmatpush1.msra.mxu0 0.0
    %123 = vmatprep.subr.mxu0 0.0
    %124 = vmatpush1.msra.mxu0 0.0
    %125 = vmatprep.subr.mxu0 0.0
    %126 = vmatpush1.msra.mxu0 0.0
    %127 = vmatprep.subr.mxu0 0.0
    %128 = vmatpush1.msra.mxu0 0.0
    %129 = vmatprep.subr.mxu0 0.0
    %130 = vmatpush1.msra.mxu0 0.0
    %131 = vmatprep.subr.mxu0 0.0
    %132 = vmatpush1.msra.mxu0 0.0
    %133 = vmatprep.subr.mxu0 0.0
    %134 = vmatpush1.msra.mxu0 0.0
    %135 = vmatprep.subr.mxu0 0.0
    %136 = vmatpush1.msra.mxu0 0.0
    %137 = vmatprep.subr.mxu0 0.0
    %138 = vmatpush1.msra.mxu0 0.0
    %139 = vmatprep.subr.mxu0 0.0
    %140 = vmatpush1.msra.mxu0 0.0
    %141 = vmatprep.subr.mxu0 0.0
    %142 = vmatpush1.msra.mxu0 0.0
    %143 = vmatprep.subr.mxu0 0.0
    %144 = vmatpush1.msra.mxu0 0.0
    %145 = vmatprep.subr.mxu0 0.0
    %146 = vmatpush1.msra.mxu0 0.0
    %147 = vmatprep.subr.mxu0 0.0
    %148 = vmatpush1.msra.mxu0 0.0
    %149 = vmatprep.subr.mxu0 0.0
    %150 = vmatpush1.msra.mxu0 0.0
    %151 = vmatprep.subr.mxu0 0.0
    %152 = vmatpush1.msra.mxu0 0.0
    %153 = vmatprep.subr.mxu0 0.0
    %154 = vmatpush1.msra.mxu0 0.0
    %155 = vmatprep.subr.mxu0 0.0
    %156 = vmatpush1.msra.mxu0 0.0
    %157 = vmatprep.subr.mxu0 0.0
    %158 = vmatpush1.msra.mxu0 0.0
    %159 = vmatprep.subr.mxu0 0.0
    %160 = vmatpush1.msra.mxu0 0.0
    %161 = vmatprep.subr.mxu0 0.0
    %162 = vmatpush1.msra.mxu0 0.0
    %163 = vmatprep.subr.mxu0 0.0
    %164 = vmatpush1.msra.mxu0 0.0
    %165 = vmatprep.subr.mxu0 0.0
    %166 = vmatpush1.msra.mxu0 0.0
    %167 = vmatprep.subr.mxu0 0.0
    %168 = vmatpush1.msra.mxu0 0.0
    %169 = vmatprep.subr.mxu0 0.0
    %170 = vmatpush1.msra.mxu0 0.0
    %171 = vmatprep.subr.mxu0 0.0
    %172 = vmatpush1.msra.mxu0 0.0
    %173 = vmatprep.subr.mxu0 0.0
    %174 = vmatpush1.msra.mxu0 0.0
    %175 = vmatprep.subr.mxu0 0.0
    %176 = vmatpush1.msra.mxu0 0.0
    %177 = vmatprep.mubr.f32.mxu0 0.0
    %v178 = vand.u32 %v26, 4294901760
    %179 = vmatmul.mubr.f32.gmra.mrb[0].mxu0 %v178
    %v180 = vpop.f32.mrb[0].mxu0
    %v181 = vadd.f32 %v105, %v180
    %v182 = vpop.f32.mrb[0].mxu0
    %183 = vdwg.mxu0
    %184 = vmatprep.subr.mxu0 0.0
    %v185 = vand.u32 %v30, 4294901760
    %v186 = vsub.f32 %v30, %v185
    %187 = vmatpush1.msra.mxu0 %v186
    %188 = vmatprep.subr.mxu0 0.0
    %189 = vmatpush1.msra.mxu0 0.0
    %190 = vmatprep.subr.mxu0 0.0
    %191 = vmatpush1.msra.mxu0 0.0
    %192 = vmatprep.subr.mxu0 0.0
    %193 = vmatpush1.msra.mxu0 0.0
    %194 = vmatprep.subr.mxu0 0.0
    %195 = vmatpush1.msra.mxu0 0.0
    %196 = vmatprep.subr.mxu0 0.0
    %197 = vmatpush1.msra.mxu0 0.0
    %198 = vmatprep.subr.mxu0 0.0
    %199 = vmatpush1.msra.mxu0 0.0
    %200 = vmatprep.subr.mxu0 0.0
    %201 = vmatpush1.msra.mxu0 0.0
    %202 = vmatprep.subr.mxu0 0.0
    %203 = vmatpush1.msra.mxu0 0.0
    %204 = vmatprep.subr.mxu0 0.0
    %205 = vmatpush1.msra.mxu0 0.0
    %206 = vmatprep.subr.mxu0 0.0
    %207 = vmatpush1.msra.mxu0 0.0
    %208 = vmatprep.subr.mxu0 0.0
    %209 = vmatpush1.msra.mxu0 0.0
    %210 = vmatprep.subr.mxu0 0.0
    %211 = vmatpush1.msra.mxu0 0.0
    %212 = vmatprep.subr.mxu0 0.0
    %213 = vmatpush1.msra.mxu0 0.0
    %214 = vmatprep.subr.mxu0 0.0
    %215 = vmatpush1.msra.mxu0 0.0
    %216 = vmatprep.subr.mxu0 0.0
    %217 = vmatpush1.msra.mxu0 0.0
    %218 = vmatprep.subr.mxu0 0.0
    %219 = vmatpush1.msra.mxu0 0.0
    %220 = vmatprep.subr.mxu0 0.0
    %221 = vmatpush1.msra.mxu0 0.0
    %222 = vmatprep.subr.mxu0 0.0
    %223 = vmatpush1.msra.mxu0 0.0
    %224 = vmatprep.subr.mxu0 0.0
    %225 = vmatpush1.msra.mxu0 0.0
    %226 = vmatprep.subr.mxu0 0.0
    %227 = vmatpush1.msra.mxu0 0.0
    %228 = vmatprep.subr.mxu0 0.0
    %229 = vmatpush1.msra.mxu0 0.0
    %230 = vmatprep.subr.mxu0 0.0
    %231 = vmatpush1.msra.mxu0 0.0
    %232 = vmatprep.subr.mxu0 0.0
    %233 = vmatpush1.msra.mxu0 0.0
    %234 = vmatprep.subr.mxu0 0.0
    %235 = vmatpush1.msra.mxu0 0.0
    %236 = vmatprep.subr.mxu0 0.0
    %237 = vmatpush1.msra.mxu0 0.0
    %238 = vmatprep.subr.mxu0 0.0
    %239 = vmatpush1.msra.mxu0 0.0
    %240 = vmatprep.subr.mxu0 0.0
    %241 = vmatpush1.msra.mxu0 0.0
    %242 = vmatprep.subr.mxu0 0.0
    %243 = vmatpush1.msra.mxu0 0.0
    %244 = vmatprep.subr.mxu0 0.0
    %245 = vmatpush1.msra.mxu0 0.0
    %246 = vmatprep.subr.mxu0 0.0
    %247 = vmatpush1.msra.mxu0 0.0
    %248 = vmatprep.subr.mxu0 0.0
    %249 = vmatpush1.msra.mxu0 0.0
    %250 = vmatprep.mubr.f32.mxu0 0.0
    %v251 = vand.u32 %v26, 4294901760
    %v252 = vsub.f32 %v26, %v251
    %253 = vmatmul.mubr.f32.gmra.mrb[0].mxu0 %v252
    %v254 = vpop.f32.mrb[0].mxu0
    %v255 = vadd.f32 %v181, %v254
    %v256 = vpop.f32.mrb[0].mxu0
    %257 = vdwg.mxu0
    %258 = vmatprep.subr.mxu0 0.0
    %v259 = vand.u32 %v30, 4294901760
    %260 = vmatpush1.msra.mxu0 %v259
    %261 = vmatprep.subr.mxu0 0.0
    %262 = vmatpush1.msra.mxu0 0.0
    %263 = vmatprep.subr.mxu0 0.0
    %264 = vmatpush1.msra.mxu0 0.0
    %265 = vmatprep.subr.mxu0 0.0
    %266 = vmatpush1.msra.mxu0 0.0
    %267 = vmatprep.subr.mxu0 0.0
    %268 = vmatpush1.msra.mxu0 0.0
    %269 = vmatprep.subr.mxu0 0.0
    %270 = vmatpush1.msra.mxu0 0.0
    %271 = vmatprep.subr.mxu0 0.0
    %272 = vmatpush1.msra.mxu0 0.0
    %273 = vmatprep.subr.mxu0 0.0
    %274 = vmatpush1.msra.mxu0 0.0
    %275 = vmatprep.subr.mxu0 0.0
    %276 = vmatpush1.msra.mxu0 0.0
    %277 = vmatprep.subr.mxu0 0.0
    %278 = vmatpush1.msra.mxu0 0.0
    %279 = vmatprep.subr.mxu0 0.0
    %280 = vmatpush1.msra.mxu0 0.0
    %281 = vmatprep.subr.mxu0 0.0
    %282 = vmatpush1.msra.mxu0 0.0
    %283 = vmatprep.subr.mxu0 0.0
    %284 = vmatpush1.msra.mxu0 0.0
    %285 = vmatprep.subr.mxu0 0.0
    %286 = vmatpush1.msra.mxu0 0.0
    %287 = vmatprep.subr.mxu0 0.0
    %288 = vmatpush1.msra.mxu0 0.0
    %289 = vmatprep.subr.mxu0 0.0
    %290 = vmatpush1.msra.mxu0 0.0
    %291 = vmatprep.subr.mxu0 0.0
    %292 = vmatpush1.msra.mxu0 0.0
    %293 = vmatprep.subr.mxu0 0.0
    %294 = vmatpush1.msra.mxu0 0.0
    %295 = vmatprep.subr.mxu0 0.0
    %296 = vmatpush1.msra.mxu0 0.0
    %297 = vmatprep.subr.mxu0 0.0
    %298 = vmatpush1.msra.mxu0 0.0
    %299 = vmatprep.subr.mxu0 0.0
    %300 = vmatpush1.msra.mxu0 0.0
    %301 = vmatprep.subr.mxu0 0.0
    %302 = vmatpush1.msra.mxu0 0.0
    %303 = vmatprep.subr.mxu0 0.0
    %304 = vmatpush1.msra.mxu0 0.0
    %305 = vmatprep.subr.mxu0 0.0
    %306 = vmatpush1.msra.mxu0 0.0
    %307 = vmatprep.subr.mxu0 0.0
    %308 = vmatpush1.msra.mxu0 0.0
    %309 = vmatprep.subr.mxu0 0.0
    %310 = vmatpush1.msra.mxu0 0.0
    %311 = vmatprep.subr.mxu0 0.0
    %312 = vmatpush1.msra.mxu0 0.0
    %313 = vmatprep.subr.mxu0 0.0
    %314 = vmatpush1.msra.mxu0 0.0
    %315 = vmatprep.subr.mxu0 0.0
    %316 = vmatpush1.msra.mxu0 0.0
    %317 = vmatprep.subr.mxu0 0.0
    %318 = vmatpush1.msra.mxu0 0.0
    %319 = vmatprep.subr.mxu0 0.0
    %320 = vmatpush1.msra.mxu0 0.0
    %321 = vmatprep.subr.mxu0 0.0
    %322 = vmatpush1.msra.mxu0 0.0
    %323 = vmatprep.mubr.f32.mxu0 0.0
    %v324 = vand.u32 %v26, 4294901760
    %v325 = vsub.f32 %v26, %v324
    %v326 = vand.u32 %v325, 4294901760
    %327 = vmatmul.mubr.f32.gmra.mrb[0].mxu0 %v326
    %v328 = vpop.f32.mrb[0].mxu0
    %v329 = vadd.f32 %v255, %v328
    %v330 = vpop.f32.mrb[0].mxu0
    %331 = vdwg.mxu0
    %332 = vmatprep.subr.mxu0 0.0
    %v333 = vand.u32 %v30, 4294901760
    %v334 = vsub.f32 %v30, %v333
    %v335 = vand.u32 %v334, 4294901760
    %336 = vmatpush1.msra.mxu0 %v335
    %337 = vmatprep.subr.mxu0 0.0
    %338 = vmatpush1.msra.mxu0 0.0
    %339 = vmatprep.subr.mxu0 0.0
    %340 = vmatpush1.msra.mxu0 0.0
    %341 = vmatprep.subr.mxu0 0.0
    %342 = vmatpush1.msra.mxu0 0.0
    %343 = vmatprep.subr.mxu0 0.0
    %344 = vmatpush1.msra.mxu0 0.0
    %345 = vmatprep.subr.mxu0 0.0
    %346 = vmatpush1.msra.mxu0 0.0
    %347 = vmatprep.subr.mxu0 0.0
    %348 = vmatpush1.msra.mxu0 0.0
    %349 = vmatprep.subr.mxu0 0.0
    %350 = vmatpush1.msra.mxu0 0.0
    %351 = vmatprep.subr.mxu0 0.0
    %352 = vmatpush1.msra.mxu0 0.0
    %353 = vmatprep.subr.mxu0 0.0
    %354 = vmatpush1.msra.mxu0 0.0
    %355 = vmatprep.subr.mxu0 0.0
    %356 = vmatpush1.msra.mxu0 0.0
    %357 = vmatprep.subr.mxu0 0.0
    %358 = vmatpush1.msra.mxu0 0.0
    %359 = vmatprep.subr.mxu0 0.0
    %360 = vmatpush1.msra.mxu0 0.0
    %361 = vmatprep.subr.mxu0 0.0
    %362 = vmatpush1.msra.mxu0 0.0
    %363 = vmatprep.subr.mxu0 0.0
    %364 = vmatpush1.msra.mxu0 0.0
    %365 = vmatprep.subr.mxu0 0.0
    %366 = vmatpush1.msra.mxu0 0.0
    %367 = vmatprep.subr.mxu0 0.0
    %368 = vmatpush1.msra.mxu0 0.0
    %369 = vmatprep.subr.mxu0 0.0
    %370 = vmatpush1.msra.mxu0 0.0
    %371 = vmatprep.subr.mxu0 0.0
    %372 = vmatpush1.msra.mxu0 0.0
    %373 = vmatprep.subr.mxu0 0.0
    %374 = vmatpush1.msra.mxu0 0.0
    %375 = vmatprep.subr.mxu0 0.0
    %376 = vmatpush1.msra.mxu0 0.0
    %377 = vmatprep.subr.mxu0 0.0
    %378 = vmatpush1.msra.mxu0 0.0
    %379 = vmatprep.subr.mxu0 0.0
    %380 = vmatpush1.msra.mxu0 0.0
    %381 = vmatprep.subr.mxu0 0.0
    %382 = vmatpush1.msra.mxu0 0.0
    %383 = vmatprep.subr.mxu0 0.0
    %384 = vmatpush1.msra.mxu0 0.0
    %385 = vmatprep.subr.mxu0 0.0
    %386 = vmatpush1.msra.mxu0 0.0
    %387 = vmatprep.subr.mxu0 0.0
    %388 = vmatpush1.msra.mxu0 0.0
    %389 = vmatprep.subr.mxu0 0.0
    %390 = vmatpush1.msra.mxu0 0.0
    %391 = vmatprep.subr.mxu0 0.0
    %392 = vmatpush1.msra.mxu0 0.0
    %393 = vmatprep.subr.mxu0 0.0
    %394 = vmatpush1.msra.mxu0 0.0
    %395 = vmatprep.subr.mxu0 0.0
    %396 = vmatpush1.msra.mxu0 0.0
    %397 = vmatprep.subr.mxu0 0.0
    %398 = vmatpush1.msra.mxu0 0.0
    %399 = vmatprep.mubr.f32.mxu0 0.0
    %v400 = vand.u32 %v26, 4294901760
    %401 = vmatmul.mubr.f32.gmra.mrb[0].mxu0 %v400
    %v402 = vpop.f32.mrb[0].mxu0
    %v403 = vadd.f32 %v329, %v402
    %v404 = vpop.f32.mrb[0].mxu0
    %405 = vdwg.mxu0
    %406 = vmatprep.subr.mxu0 0.0
    %v407 = vand.u32 %v30, 4294901760
    %408 = vmatpush1.msra.mxu0 %v407
    %409 = vmatprep.subr.mxu0 0.0
    %410 = vmatpush1.msra.mxu0 0.0
    %411 = vmatprep.subr.mxu0 0.0
    %412 = vmatpush1.msra.mxu0 0.0
    %413 = vmatprep.subr.mxu0 0.0
    %414 = vmatpush1.msra.mxu0 0.0
    %415 = vmatprep.subr.mxu0 0.0
    %416 = vmatpush1.msra.mxu0 0.0
    %417 = vmatprep.subr.mxu0 0.0
    %418 = vmatpush1.msra.mxu0 0.0
    %419 = vmatprep.subr.mxu0 0.0
    %420 = vmatpush1.msra.mxu0 0.0
    %421 = vmatprep.subr.mxu0 0.0
    %422 = vmatpush1.msra.mxu0 0.0
    %423 = vmatprep.subr.mxu0 0.0
    %424 = vmatpush1.msra.mxu0 0.0
    %425 = vmatprep.subr.mxu0 0.0
    %426 = vmatpush1.msra.mxu0 0.0
    %427 = vmatprep.subr.mxu0 0.0
    %428 = vmatpush1.msra.mxu0 0.0
    %429 = vmatprep.subr.mxu0 0.0
    %430 = vmatpush1.msra.mxu0 0.0
    %431 = vmatprep.subr.mxu0 0.0
    %432 = vmatpush1.msra.mxu0 0.0
    %433 = vmatprep.subr.mxu0 0.0
    %434 = vmatpush1.msra.mxu0 0.0
    %435 = vmatprep.subr.mxu0 0.0
    %436 = vmatpush1.msra.mxu0 0.0
    %437 = vmatprep.subr.mxu0 0.0
    %438 = vmatpush1.msra.mxu0 0.0
    %439 = vmatprep.subr.mxu0 0.0
    %440 = vmatpush1.msra.mxu0 0.0
    %441 = vmatprep.subr.mxu0 0.0
    %442 = vmatpush1.msra.mxu0 0.0
    %443 = vmatprep.subr.mxu0 0.0
    %444 = vmatpush1.msra.mxu0 0.0
    %445 = vmatprep.subr.mxu0 0.0
    %446 = vmatpush1.msra.mxu0 0.0
    %447 = vmatprep.subr.mxu0 0.0
    %448 = vmatpush1.msra.mxu0 0.0
    %449 = vmatprep.subr.mxu0 0.0
    %450 = vmatpush1.msra.mxu0 0.0
    %451 = vmatprep.subr.mxu0 0.0
    %452 = vmatpush1.msra.mxu0 0.0
    %453 = vmatprep.subr.mxu0 0.0
    %454 = vmatpush1.msra.mxu0 0.0
    %455 = vmatprep.subr.mxu0 0.0
    %456 = vmatpush1.msra.mxu0 0.0
    %457 = vmatprep.subr.mxu0 0.0
    %458 = vmatpush1.msra.mxu0 0.0
    %459 = vmatprep.subr.mxu0 0.0
    %460 = vmatpush1.msra.mxu0 0.0
    %461 = vmatprep.subr.mxu0 0.0
    %462 = vmatpush1.msra.mxu0 0.0
    %463 = vmatprep.subr.mxu0 0.0
    %464 = vmatpush1.msra.mxu0 0.0
    %465 = vmatprep.subr.mxu0 0.0
    %466 = vmatpush1.msra.mxu0 0.0
    %467 = vmatprep.subr.mxu0 0.0
    %468 = vmatpush1.msra.mxu0 0.0
    %469 = vmatprep.subr.mxu0 0.0
    %470 = vmatpush1.msra.mxu0 0.0
    %471 = vmatprep.mubr.f32.mxu0 0.0
    %v472 = vand.u32 %v26, 4294901760
    %473 = vmatmul.mubr.f32.gmra.mrb[0].mxu0 %v472
    %v474 = vpop.f32.mrb[0].mxu0
    %v475 = vadd.f32 %v403, %v474
    %v476 = vpop.f32.mrb[0].mxu0
    %477 = vdwg.mxu0
    %v478 = vlaneseq
    %v479 = vand.u32 %v478, 127
    %v480 = vand.u32 %v479, 31
    %vm481 = vcmp.eq.s32.totalorder %v480, 0
    %v482 = vand.u32 2147483647, %v475
    %vm483 = vcmp.le.f32.partialorder %v482, 0.7853982
    %vm484 = vcmp.lt.s32.totalorder %v475, 0
    %v485 = vand.u32 %v475, 2139095040
    %v486 = vshrl.u32 %v485, 23
    %v487 = vsub.s32 %v486, 127
    %v488 = vand.u32 2147483647, %v475
    %v489 = vand.u32 %v488, 8388607
    %v490 = vor.u32 %v489, 8388608
    %v491 = vsub.s32 0, %v490
    %v492 = vadd.s32 %v487, 1
    %vm493 = vcmp.gt.s32.totalorder %v492, 0
    %v494 = vsel %vm493, %v492, 0
    %v495 = vshrl.u32 %v494, 5
    %v496 = vand.u32 %v494, 31
    %v497 = vsub.s32 32, %v496
    %v498 = vshrl.u32 683565275, %v497
    %v499 = vshll.u32 683565275, %v496
    %v500 = vshrl.u32 2475754826, %v497
    %v501 = vor.u32 %v499, %v500
    %v502 = vshll.u32 2475754826, %v496
    %v503 = vshrl.u32 2131351028, %v497
    %v504 = vor.u32 %v502, %v503
    %v505 = vshll.u32 2131351028, %v496
    %v506 = vshrl.u32 2102212464, %v497
    %v507 = vor.u32 %v505, %v506
    %v508 = vshll.u32 2102212464, %v496
    %v509 = vshrl.u32 920167782, %v497
    %v510 = vor.u32 %v508, %v509
    %v511 = vshll.u32 920167782, %v496
    %v512 = vshrl.u32 1326507024, %v497
    %v513 = vor.u32 %v511, %v512
    %vm514 = vcmp.lt.s32.totalorder %v495, 1
    %vm515 = vcmp.lt.s32.totalorder %v495, 2
    %vm516 = vcmp.lt.s32.totalorder %v495, 3
    %vm517 = vcmp.lt.s32.totalorder %v495, 4
    %v518 = vsel %vm514, %v498, %v501
    %v519 = vsel %vm517, %v507, 2102212464
    %v520 = vsel %vm516, %v504, %v519
    %v521 = vsel %vm515, %v518, %v520
    %v522 = vsel %vm514, %v501, %v504
    %v523 = vsel %vm517, %v510, 920167782
    %v524 = vsel %vm516, %v507, %v523
    %v525 = vsel %vm515, %v522, %v524
    %v526 = vsel %vm514, %v504, %v507
    %v527 = vsel %vm517, %v513, 1326507024
    %v528 = vsel %vm516, %v510, %v527
    %v529 = vsel %vm515, %v526, %v528
    %v530 = vshll.u32 %v490, 8
    %v531 = vmul.u32.u64.compose %v530, %v529
    %v532 = vextract.low.u32 %v531
    %v533 = vextract.high.u32 %v531
    %v534 = vmul.u32.u64.compose %v530, %v525
    %v535 = vextract.low.u32 %v534
    %v536 = vextract.high.u32 %v534
    %v537 = vmul.u32 %v530, %v521
    %v538 = vadd.s32 %v533, %v535
    %vm539 = vc.u32 %v533, %v535
    %v540 = vadd.s32 %v536, 1
    %v541 = vsel %vm539, %v540, %v536
    %v542 = vadd.s32 %v537, %v541
    %v543 = vadd.s32 %v542, 536870912
    %v544 = vshrl.u32 %v543, 30
    %v545 = vshll.u32 %v544, 30
    %v546 = vsub.s32 %v542, %v545
    %vm547 = vcmp.lt.s32.totalorder %v546, 0
    %v548 = vsub.s32 0, %v546
    %v549 = vsel %vm547, %v548, %v546
    %v550 = vclz %v549
    %v551 = vsub.s32 %v550, 2
    %vm552 = vcmp.gt.s32.totalorder 0, %v551
    %v553 = vsel %vm552, 0, %v551
    %v554 = vsub.s32 32, %v553
    %v555 = vshll.u32 %v546, %v553
    %v556 = vshrl.u32 %v538, %v554
    %v557 = vor.u32 %v555, %v556
    %v558 = vsub.s32 4294967266, %v553
    %v559 = vadd.s32 %v558, 127
    %v560 = vshll.u32 %v559, 23
    %v561 = vor.u32 4788187, %v560
    %v562 = vand.u32 2147483647, %v561
    %v564 = vcvt.s32.f32 %v557
    %v565 = vmul.f32 %v564, %v562
    %v566 = vxor.u32 %v565, 2147483648
    %v567 = vsel %vm484, %v566, %v565
    %v568 = vsub.s32 4, %v544
    %v569 = vsel %vm484, %v568, %v544
    %v570 = vsel %vm483, %v475, %v567
    %v571 = vsel %vm483, 0, %v569
    %v572 = vcosq.f32.pop %v570
    %v573 = vsinq.f32.pop %v570
    %vm574 = vweird.f32 %v475
    %v575 = vadd.s32 %v571, 3
    %v576 = vand.u32 %v575, 3
    %vm577 = vcmp.lt.s32.totalorder %v576, 2
    %vm578 = vcmp.eq.s32.totalorder %v576, 0
    %v579 = vxor.u32 %v573, 2147483648
    %v580 = vsel %vm578, %v572, %v579
    %vm581 = vcmp.eq.s32.totalorder %v576, 2
    %v582 = vxor.u32 %v572, 2147483648
    %v583 = vsel %vm581, %v582, %v573
    %v584 = vsel %vm577, %v580, %v583
    %v585 = vsel %vm574, nan, %v584
    %v586 = vsel %vm481, %v475, %v585
    %587 = vst [vmem:[#allocation2] sm:$0xff] %v586
    // Predicated region
    $region14: #{tpu_custom_call.1} parent=1 // pred_check
      _
    $region15: #{tpu_custom_call.1} parent=1 // pred_check_branch
      %589 = sbr.rel (0) target = $region17
    $region16: #{tpu_custom_call.1} parent=1 // pred_region
      %s591 = ssub.s32 128, 128
      %592 = vsyncadd [#allocation3], %s591
      %s594 = sshll.u32 [#allocation2], 4
      %s595 = int_to_ptr.vmem [resolvable:$true] %s594
      %597 = dma.vmem_to_hbm [thread:$0]  %s595, 128, %s3, [#allocation3]
    $region17: #{tpu_custom_call.1} parent=1 // pred_fallthru
      _
    // Predicated region
    $region18: #{tpu_custom_call.1} parent=1 // pred_check
      _
    $region19: #{tpu_custom_call.1} parent=1 // pred_check_branch
      %599 = sbr.rel (0) target = $region21
    $region20: #{tpu_custom_call.1} parent=1 // pred_region
      %600 = dma.done [#allocation3], 128
    $region21: #{tpu_custom_call.1} parent=1 // pred_fallthru
      _
    %601 = vsyncpa [#allocation3], 1

</llo_original>
